<compile_context>
chip_gen: v5e
topology: v5e:2x2
jax: 0.10.0
libtpu: 0.0.40
codegen_flags: <defaults>
</compile_context>

<pallas_src>
import functools
import math

import jax
import jax.numpy as jnp
from jax.experimental import pallas as pl
from jax.experimental.pallas import tpu as pltpu

_HALF_LOG_2PI = 0.5 * math.log(2.0 * math.pi)


def _round_up(x, m):
    return ((x + m - 1) // m) * m


def _loss_kernel(state_ref, mean_ref, sig_ref, action_ref, phi_ref,
                 out_ref, acc_ref, *, total_b, out_dim, tile_b, needs_mask):
    t = pl.program_id(0)
    nt = pl.num_programs(0)

    @pl.when(t == 0)
    def _():
        acc_ref[...] = jnp.zeros_like(acc_ref)

    state = state_ref[...]          # (TB, Ds)
    mean = mean_ref[...]            # (TB, Da)
    sig = sig_ref[...]              # (TB, Da)
    action = action_ref[...]        # (TB, Da)

    # Normal(mean, sig).log_prob(action), summed over the action dim.
    z = (action - mean) / sig
    logprob = -0.5 * (z * z) - jnp.log(sig) - _HALF_LOG_2PI     # (TB, Da)
    lp_sum = jnp.sum(logprob, axis=1, keepdims=True)            # (TB, 1)

    rew1 = jnp.sum(state, axis=1, keepdims=True)                # (TB, 1)
    rew2 = jnp.sum(action, axis=1, keepdims=True)               # (TB, 1)
    rews = jnp.concatenate([rew1, rew2], axis=1)                # (TB, 2)

    if needs_mask:
        # Ragged last tile: zero out padded rows (where() also discards any
        # inf/NaN coming from out-of-bounds garbage before it can propagate).
        row = jax.lax.broadcasted_iota(jnp.int32, (tile_b, 1), 0)
        valid = (row + t * tile_b) < total_b                    # (TB, 1)
        lp_sum = jnp.where(valid, lp_sum, 0.0)
        rews = jnp.where(valid, rews, 0.0)

    # acc[0,0] += sum_b rew1[b]*lp_sum[b] ; acc[0,1] += sum_b rew2[b]*lp_sum[b]
    acc_ref[...] += jnp.sum(rews * lp_sum, axis=0, keepdims=True)   # (1, 2)

    @pl.when(t == nt - 1)
    def _():
        # phi_ref: (out_dim, 2), col 0 = phi, col 1 = phi2.
        phi_sums = jnp.sum(phi_ref[...], axis=0, keepdims=True)     # (1, 2)
        total = jnp.sum(phi_sums * acc_ref[...], keepdims=True)     # (1, 1)
        out_ref[...] = total * (-1.0 / float(out_dim * total_b))


def structured_loss_forward(state, mean, sig, action, phi_packed, *, tile_b=512):
    """StructuredLossMFRLNN.forward -> scalar loss.

    state:       [B, Ds] float32
    mean/sig/action: [B, Da] float32 (sig > 0)
    phi_packed:  [out_dim, 2] float32, column 0 = phi, column 1 = phi2.

    Note: self.batch_size cancels out of the mean analytically, so it is not an input.
    """
    b, ds = state.shape
    da = action.shape[1]
    out_dim = phi_packed.shape[0]

    tb = _round_up(min(tile_b, _round_up(b, 8)), 8)
    num_tiles = (b + tb - 1) // tb
    needs_mask = (num_tiles * tb) != b

    kernel = functools.partial(
        _loss_kernel, total_b=b, out_dim=out_dim, tile_b=tb, needs_mask=needs_mask)

    out = pl.pallas_call(
        kernel,
        out_shape=jax.ShapeDtypeStruct((1, 1), jnp.float32),
        grid_spec=pltpu.PrefetchScalarGridSpec(
            num_scalar_prefetch=0,
            grid=(num_tiles,),
            in_specs=[
                pl.BlockSpec((tb, ds), lambda i: (i, 0)),
                pl.BlockSpec((tb, da), lambda i: (i, 0)),
                pl.BlockSpec((tb, da), lambda i: (i, 0)),
                pl.BlockSpec((tb, da), lambda i: (i, 0)),
                pl.BlockSpec((out_dim, 2), lambda i: (0, 0)),  # params stay VMEM-resident
            ],
            out_specs=pl.BlockSpec((1, 1), lambda i: (0, 0)),
            scratch_shapes=[pltpu.VMEM((1, 2), jnp.float32)],
        ),
        compiler_params=pltpu.CompilerParams(
            # Batch axis carries the running accumulator -> reduction -> "arbitrary".
            dimension_semantics=("arbitrary",),
        ),
    )(state, mean, sig, action, phi_packed)
    return out[0, 0]


def init_params(out_dim):
    # phi = ones(out_dim) as in reset().
    # TODO(synk): self.phi2 is referenced in forward() but never created in the
    # original module's reset(); it is materialized here as ones(out_dim) too.
    phi = jnp.ones((out_dim,), jnp.float32)
    phi2 = jnp.ones((out_dim,), jnp.float32)
    # Packed (out_dim, 2) so the kernel needs a single parameter DMA.
    return {"phi_packed": jnp.stack([phi, phi2], axis=1)}


def _reference_loss(state, mean, sig, action, phi, phi2, batch_size):
    """Direct jnp transcription of the PyTorch forward (materializes [P, B])."""
    logprob = (-0.5 * ((action - mean) / sig) ** 2
               - jnp.log(sig) - 0.5 * math.log(2.0 * math.pi))
    rew1 = jnp.sum(state, axis=1)
    rew2 = jnp.sum(action, axis=1)
    phi_rep = jnp.tile(phi, batch_size).reshape(-1, 1)
    phi2_rep = jnp.tile(phi2, batch_size).reshape(-1, 1)
    l = phi_rep * rew1 + phi2_rep * rew2
    sel = l * jnp.sum(logprob, axis=-1)
    return -jnp.mean(sel)


if __name__ == "__main__":
    key = jax.random.PRNGKey(0)
    ks, km, ksig, ka = jax.random.split(key, 4)

    B, DS, DA, OUT_DIM, BATCH_SIZE = 8, 3, 2, 2, 8
    state = jax.random.normal(ks, (B, DS), jnp.float32)
    mean = jax.random.normal(km, (B, DA), jnp.float32)
    sig = jax.random.uniform(ksig, (B, DA), jnp.float32, 0.2, 1.0)
    action = jax.random.normal(ka, (B, DA), jnp.float32)

    params = init_params(OUT_DIM)

    loss = structured_loss_forward(state, mean, sig, action, params["phi_packed"])
    loss = jax.block_until_ready(loss)

    ref = _reference_loss(state, mean, sig, action,
                          params["phi_packed"][:, 0], params["phi_packed"][:, 1],
                          BATCH_SIZE)

    assert loss.shape == (), loss.shape
    assert bool(jnp.isfinite(loss))
    assert bool(jnp.allclose(loss, ref, rtol=1e-4, atol=1e-4)), (float(loss), float(ref))
    print("KERNEL_OK")
</pallas_src>

<mosaic_0001>
module attributes {stable_mosaic.version = 11 : i64} {
  func.func @_loss_kernel(%arg0: i32, %arg1: memref<8x3xf32, #tpu.memory_space<vmem>>, %arg2: memref<8x2xf32, #tpu.memory_space<vmem>>, %arg3: memref<8x2xf32, #tpu.memory_space<vmem>>, %arg4: memref<8x2xf32, #tpu.memory_space<vmem>>, %arg5: memref<2x2xf32, #tpu.memory_space<vmem>>, %arg6: memref<1x1xf32, #tpu.memory_space<vmem>>, %arg7: memref<1x2xf32, #tpu.memory_space<vmem>>) attributes {dimension_semantics = [#tpu.dimension_semantics<arbitrary>], iteration_bounds = array<i64: 1>, scalar_prefetch = 0 : i64, scratch_operands = 1 : i64, tpu.core_type = #tpu.core_type<tc>, window_params = [{transform_indices = @transform_0, window_bounds = array<i64: 8, 3>}, {transform_indices = @transform_1, window_bounds = array<i64: 8, 2>}, {transform_indices = @transform_2, window_bounds = array<i64: 8, 2>}, {transform_indices = @transform_3, window_bounds = array<i64: 8, 2>}, {pipeline_mode = #tpu.pipeline_mode<synchronous>, transform_indices = @transform_4, window_bounds = array<i64: 2, 2>}, {pipeline_mode = #tpu.pipeline_mode<synchronous>, transform_indices = @transform_5, window_bounds = array<i64: 1, 1>}]} {
    %c0_i32 = arith.constant 0 : i32
    %0 = arith.cmpi eq, %arg0, %c0_i32 : i32
    %1 = arith.extui %0 : i1 to i32
    %c0_i32_0 = arith.constant 0 : i32
    %2 = arith.cmpi ne, %1, %c0_i32_0 : i32
    scf.if %2 {
      %cst_19 = arith.constant 0.000000e+00 : f32
      %33 = vector.broadcast %cst_19 : f32 to vector<1x2xf32>
      %c0_20 = arith.constant 0 : index
      %c0_21 = arith.constant 0 : index
      %34 = vector.load %arg7[%c0_20, %c0_21] : memref<1x2xf32, #tpu.memory_space<vmem>>, vector<1x2xf32>
      tpu.vector_store %arg7[%c0_20, %c0_21], %33 {strides = array<i32>} : memref<1x2xf32, #tpu.memory_space<vmem>>, vector<1x2xf32>,
    } else {
    }
    %c0 = arith.constant 0 : index
    %c0_1 = arith.constant 0 : index
    %3 = vector.load %arg1[%c0, %c0_1] : memref<8x3xf32, #tpu.memory_space<vmem>>, vector<8x3xf32>
    %c0_2 = arith.constant 0 : index
    %c0_3 = arith.constant 0 : index
    %4 = vector.load %arg2[%c0_2, %c0_3] : memref<8x2xf32, #tpu.memory_space<vmem>>, vector<8x2xf32>
    %c0_4 = arith.constant 0 : index
    %c0_5 = arith.constant 0 : index
    %5 = vector.load %arg3[%c0_4, %c0_5] : memref<8x2xf32, #tpu.memory_space<vmem>>, vector<8x2xf32>
    %c0_6 = arith.constant 0 : index
    %c0_7 = arith.constant 0 : index
    %6 = vector.load %arg4[%c0_6, %c0_7] : memref<8x2xf32, #tpu.memory_space<vmem>>, vector<8x2xf32>
    %7 = arith.subf %6, %4 : vector<8x2xf32>
    %8 = arith.divf %7, %5 : vector<8x2xf32>
    %9 = arith.mulf %8, %8 : vector<8x2xf32>
    %cst = arith.constant -5.000000e-01 : f32
    %10 = vector.broadcast %cst : f32 to vector<8x2xf32>
    %11 = arith.mulf %10, %9 : vector<8x2xf32>
    %12 = math.log %5 : vector<8x2xf32>
    %13 = arith.subf %11, %12 : vector<8x2xf32>
    %cst_8 = arith.constant 0.918938517 : f32
    %14 = vector.broadcast %cst_8 : f32 to vector<8x2xf32>
    %15 = arith.subf %13, %14 : vector<8x2xf32>
    %cst_9 = arith.constant dense<0.000000e+00> : vector<8xf32>
    %16 = vector.multi_reduction <add>, %15, %cst_9 [1] : vector<8x2xf32> to vector<8xf32>
    %17 = vector.shape_cast %16 : vector<8xf32> to vector<8x1xf32>
    %cst_10 = arith.constant dense<0.000000e+00> : vector<8xf32>
    %18 = vector.multi_reduction <add>, %3, %cst_10 [1] : vector<8x3xf32> to vector<8xf32>
    %19 = vector.shape_cast %18 : vector<8xf32> to vector<8x1xf32>
    %cst_11 = arith.constant dense<0.000000e+00> : vector<8xf32>
    %20 = vector.multi_reduction <add>, %6, %cst_11 [1] : vector<8x2xf32> to vector<8xf32>
    %21 = vector.shape_cast %20 : vector<8xf32> to vector<8x1xf32>
    %22 = tpu.concatenate %19, %21 in 1 : vector<8x1xf32>, vector<8x1xf32> -> vector<8x2xf32>
    %c0_12 = arith.constant 0 : index
    %c0_13 = arith.constant 0 : index
    %23 = vector.load %arg7[%c0_12, %c0_13] : memref<1x2xf32, #tpu.memory_space<vmem>>, vector<1x2xf32>
    %24 = vector.broadcast %17 : vector<8x1xf32> to vector<8x2xf32>
    %25 = arith.mulf %22, %24 : vector<8x2xf32>
    %cst_14 = arith.constant dense<0.000000e+00> : vector<2xf32>
    %26 = vector.multi_reduction <add>, %25, %cst_14 [0] : vector<8x2xf32> to vector<2xf32>
    %27 = vector.shape_cast %26 : vector<2xf32> to vector<1x2xf32>
    %28 = arith.addf %23, %27 : vector<1x2xf32>
    %c0_15 = arith.constant 0 : index
    %c0_16 = arith.constant 0 : index
    %29 = vector.load %arg7[%c0_15, %c0_16] : memref<1x2xf32, #tpu.memory_space<vmem>>, vector<1x2xf32>
    tpu.vector_store %arg7[%c0_15, %c0_16], %28 {strides = array<i32>} : memref<1x2xf32, #tpu.memory_space<vmem>>, vector<1x2xf32>,
    %c0_i32_17 = arith.constant 0 : i32
    %30 = arith.cmpi eq, %arg0, %c0_i32_17 : i32
    %31 = arith.extui %30 : i1 to i32
    %c0_i32_18 = arith.constant 0 : i32
    %32 = arith.cmpi ne, %31, %c0_i32_18 : i32
    scf.if %32 {
      %c0_19 = arith.constant 0 : index
      %c0_20 = arith.constant 0 : index
      %33 = vector.load %arg5[%c0_19, %c0_20] : memref<2x2xf32, #tpu.memory_space<vmem>>, vector<2x2xf32>
      %cst_21 = arith.constant dense<0.000000e+00> : vector<2xf32>
      %34 = vector.multi_reduction <add>, %33, %cst_21 [0] : vector<2x2xf32> to vector<2xf32>
      %35 = vector.shape_cast %34 : vector<2xf32> to vector<1x2xf32>
      %c0_22 = arith.constant 0 : index
      %c0_23 = arith.constant 0 : index
      %36 = vector.load %arg7[%c0_22, %c0_23] : memref<1x2xf32, #tpu.memory_space<vmem>>, vector<1x2xf32>
      %37 = arith.mulf %35, %36 : vector<1x2xf32>
      %38 = vector.shape_cast %37 : vector<1x2xf32> to vector<1x1x2xf32>
      %cst_24 = arith.constant dense<0.000000e+00> : vector<1xf32>
      %39 = vector.multi_reduction <add>, %38, %cst_24 [1, 2] : vector<1x1x2xf32> to vector<1xf32>
      %40 = vector.shape_cast %39 : vector<1xf32> to vector<1x1x1xf32>
      %41 = vector.extract %40[0, 0, 0] : f32 from vector<1x1x1xf32>
      %42 = vector.broadcast %41 : f32 to vector<1x1xf32>
      %cst_25 = arith.constant -6.250000e-02 : f32
      %43 = vector.broadcast %cst_25 : f32 to vector<1x1xf32>
      %44 = arith.mulf %42, %43 : vector<1x1xf32>
      %c0_26 = arith.constant 0 : index
      %c0_27 = arith.constant 0 : index
      %45 = vector.load %arg6[%c0_26, %c0_27] : memref<1x1xf32, #tpu.memory_space<vmem>>, vector<1x1xf32>
      tpu.vector_store %arg6[%c0_26, %c0_27], %44 {strides = array<i32>} : memref<1x1xf32, #tpu.memory_space<vmem>>, vector<1x1xf32>,
    } else {
    }
    return
  }
  func.func @transform_0(%arg0: i32) -> (i32, i32) {
    %c0_i32 = arith.constant 0 : i32
    %c0_i32_0 = arith.constant 0 : i32
    return %arg0, %c0_i32 : i32, i32
  }
  func.func @transform_1(%arg0: i32) -> (i32, i32) {
    %c0_i32 = arith.constant 0 : i32
    %c0_i32_0 = arith.constant 0 : i32
    return %arg0, %c0_i32 : i32, i32
  }
  func.func @transform_2(%arg0: i32) -> (i32, i32) {
    %c0_i32 = arith.constant 0 : i32
    %c0_i32_0 = arith.constant 0 : i32
    return %arg0, %c0_i32 : i32, i32
  }
  func.func @transform_3(%arg0: i32) -> (i32, i32) {
    %c0_i32 = arith.constant 0 : i32
    %c0_i32_0 = arith.constant 0 : i32
    return %arg0, %c0_i32 : i32, i32
  }
  func.func @transform_4(%arg0: i32) -> (i32, i32) {
    %c0_i32 = arith.constant 0 : i32
    %c0_i32_0 = arith.constant 0 : i32
    %c0_i32_1 = arith.constant 0 : i32
    return %c0_i32, %c0_i32_0 : i32, i32
  }
  func.func @transform_5(%arg0: i32) -> (i32, i32) {
    %c0_i32 = arith.constant 0 : i32
    %c0_i32_0 = arith.constant 0 : i32
    %c0_i32_1 = arith.constant 0 : i32
    return %c0_i32, %c0_i32_0 : i32, i32
  }
}

</mosaic_0001>

<llo_original>
// kernel: tpu_custom_call.1
$region0: #{tpu_custom_call.1}
  #allocation0 [shape = 'u32[]', space=smem, size = 0x4, offset = 0x4, fixed_abs, tag = 'smem constant byte address 0x4 - core index']
  #allocation1 [shape = 'u32[72,128]{1,0:T(1,128)}', space=vmem, size = 0x9000, scoped, tag = 'internal scratch']
  #allocation2 [shape = 'f32[1,2]{1,0:T(1,128)}', space=vmem, size = 0x200, scoped, tag = 'scratch operand']
  %s0 = inlined_call_operand.vmem [shape: f32[8,3], index: 0, kind: input, shape index: {}]
  %s1 = inlined_call_operand.vmem [shape: f32[8,2], index: 1, kind: input, shape index: {}]
  %s2 = inlined_call_operand.vmem [shape: f32[8,2], index: 2, kind: input, shape index: {}]
  %s3 = inlined_call_operand.vmem [shape: f32[8,2], index: 3, kind: input, shape index: {}]
  %s4 = inlined_call_operand.vmem [shape: f32[2,2], index: 4, kind: input, shape index: {}]
  %s5 = inlined_call_operand.hbm [shape: f32[1,1], index: 5, kind: output, shape index: {}]
  %s6 = sld [smem:[#allocation0]]
  $region38: #{tpu_custom_call.1} parent=0
    _
  %s8 = ssub.s32 1, %s6
  %s9 = scalar_select 0, %s8, %s6
  $region1: #{tpu_custom_call.1} parent=0
    #allocation3 [shape = 'u8[512]{0}', space=vmem, size = 0x400, scoped, tag = 'output window, operand 0, single buffered']
    #allocation4 [shape = 's32[1]{0}', space=sflag, size = 0x4, scoped, tag = 'scoped memory for tpu_custom_call.1']
    %10 = vsyncpa [#allocation4], 0
    // Predicated region
    $region2: #{tpu_custom_call.1} parent=1 // pred_check
      _
    $region3: #{tpu_custom_call.1} parent=1 // pred_check_branch
      %12 = sbr.rel (0) target = $region5
    $region4: #{tpu_custom_call.1} parent=1 // pred_region
      _
    $region5: #{tpu_custom_call.1} parent=1 // pred_fallthru
      _
    // Predicated region
    $region6: #{tpu_custom_call.1} parent=1 // pred_check
      _
    $region7: #{tpu_custom_call.1} parent=1 // pred_check_branch
      %14 = sbr.rel (0) target = $region9
    $region8: #{tpu_custom_call.1} parent=1 // pred_region
      _
    $region9: #{tpu_custom_call.1} parent=1 // pred_fallthru
      _
    // Predicated region
    $region10: #{tpu_custom_call.1} parent=1 // pred_check
      _
    $region11: #{tpu_custom_call.1} parent=1 // pred_check_branch
      %16 = sbr.rel (0) target = $region13
    $region12: #{tpu_custom_call.1} parent=1 // pred_region
      _
    $region13: #{tpu_custom_call.1} parent=1 // pred_fallthru
      _
    // Predicated region
    $region14: #{tpu_custom_call.1} parent=1 // pred_check
      _
    $region15: #{tpu_custom_call.1} parent=1 // pred_check_branch
      %18 = sbr.rel (0) target = $region17
    $region16: #{tpu_custom_call.1} parent=1 // pred_region
      _
    $region17: #{tpu_custom_call.1} parent=1 // pred_fallthru
      _
    // Predicated region
    $region18: #{tpu_custom_call.1} parent=1 // pred_check
      _
    $region19: #{tpu_custom_call.1} parent=1 // pred_check_branch
      %20 = sbr.rel (0) target = $region21
    $region20: #{tpu_custom_call.1} parent=1 // pred_region
      _
    $region21: #{tpu_custom_call.1} parent=1 // pred_fallthru
      _
    %p21 = scmp.eq.s32.totalorder 0, 0
    // Predicated region
    $region22: #{tpu_custom_call.1} parent=1 // pred_check
      %p22 = pneg %p21
    $region23: #{tpu_custom_call.1} parent=1 // pred_check_branch
      %24 = sbr.rel (%p22) target = $region25
    $region24: #{tpu_custom_call.1} parent=1 // pred_region
      %vm25 = vcmask 8192
      %26 = vst.msk [vmem:[#allocation2] sm:$0x1] %vm25, 0.0
    $region25: #{tpu_custom_call.1} parent=1 // pred_fallthru
      _
    %v27 = vld [vmem:[%s0] sm:$0xff]
    %v28 = vld [vmem:[%s1] sm:$0xff]
    %v29 = vld [vmem:[%s2] sm:$0xff]
    %v30 = vld [vmem:[%s3] sm:$0xff]
    %v31 = vsub.f32 %v30, %v28
    %v32 = vrcp.pop %v29
    %v33 = vmul.f32 %v29, %v32
    %v34 = vsub.f32 1.0, %v33
    %v35 = vmul.f32 %v32, %v34
    %v36 = vadd.f32 %v32, %v35
    %vm37 = vweird.f32 %v29
    %vm38 = vweird.f32 %v32
    %vm39 = vmor %vm37, %vm38
    %v40 = vsel %vm39, %v32, %v36
    %v41 = vand.u32 2147483647, %v29
    %vm42 = vcmp.eq.f32.partialorder %v41, 8.507059e+37
    %v43 = vand.u32 %v29, 2147483648
    %v44 = vor.u32 1.1754944e-38, %v43
    %v45 = vsel %vm42, %v44, %v40
    %v46 = vmul.f32 %v31, %v45
    %v47 = vmul.f32 %v46, %v46
    %v48 = vmul.f32 %v47, -0.5
    %v49 = vlog2.pop %v29
    %v50 = vmul.f32 %v49, 0.6931472
    %v51 = vsub.f32 %v48, %v50
    %v52 = vsub.f32 %v51, 0.9189385
    %vm53 = vcmask 15360
    %v54 = vsel %vm53, %v52, 0.0
    %55 = vadd.xlane.f32.xlu0 %v54
    %v56 = vpop.xlane.xlu0 %55
    %vm57 = vcmask 23552
    %v58 = vsel %vm57, %v27, 0.0
    %59 = vadd.xlane.f32.xlu0 %v58
    %v60 = vpop.xlane.xlu0 %59
    %v61 = vsel %vm53, %v30, 0.0
    %62 = vadd.xlane.f32.xlu0 %v61
    %v63 = vpop.xlane.xlu0 %62
    %vm64 = vcmask 7168
    %v65 = vsel %vm64, %v60, %v63
    %v66 = vld [vmem:[#allocation2] sm:$0x1]
    %v67 = vmul.f32 %v65, %v56
    %v68 = vsel %vm53, %v67, 0.0
    %v69 = vrot.slane %v68, 4
    %v70 = vadd.f32 %v68, %v69
    %v71 = vrot.slane %v70, 2
    %v72 = vadd.f32 %v70, %v71
    %v73 = vrot.slane %v72, 1
    %v74 = vadd.f32 %v72, %v73
    %v75 = vadd.f32 %v66, %v74
    %vm76 = vcmask 8192
    %77 = vst.msk [vmem:[#allocation2] sm:$0x1] %vm76, %v75
    // Predicated region
    $region26: #{tpu_custom_call.1} parent=1 // pred_check
      %p78 = pneg %p21
    $region27: #{tpu_custom_call.1} parent=1 // pred_check_branch
      %80 = sbr.rel (%p78) target = $region29
    $region28: #{tpu_custom_call.1} parent=1 // pred_region
      %v81 = vld [vmem:[%s4] sm:$0x3]
      %vm82 = vcmask 9216
      %v83 = vsel %vm82, %v81, 0.0
      %v84 = vrot.slane %v83, 4
      %v85 = vadd.f32 %v83, %v84
      %v86 = vrot.slane %v85, 2
      %v87 = vadd.f32 %v85, %v86
      %v88 = vrot.slane %v87, 1
      %v89 = vadd.f32 %v87, %v88
      %v90 = vld [vmem:[#allocation2] sm:$0x1]
      %v91 = vmul.f32 %v89, %v90
      %v92 = vsel %vm76, %v91, 0.0
      %93 = vadd.xlane.f32.xlu0 %v92
      %v94 = vpop.xlane.xlu0 %93
      %v95 = vrot.slane %v94, 4
      %v96 = vadd.f32 %v94, %v95
      %v97 = vrot.slane %v96, 2
      %v98 = vadd.f32 %v96, %v97
      %v99 = vrot.slane %v98, 1
      %v100 = vadd.f32 %v98, %v99
      %s101 = vtos %v100
      %v102 = vstv %s101
      %v103 = vmul.f32 %v102, -0.0625
      %vm104 = vcmask 0
      %105 = vst.msk [vmem:[#allocation3] sm:$0x1] %vm104, %v103
    $region29: #{tpu_custom_call.1} parent=1 // pred_fallthru
      _
    // Predicated region
    $region30: #{tpu_custom_call.1} parent=1 // pred_check
      _
    $region31: #{tpu_custom_call.1} parent=1 // pred_check_branch
      %107 = sbr.rel (0) target = $region33
    $region32: #{tpu_custom_call.1} parent=1 // pred_region
      %109 = vsyncadd [#allocation4], 0
      %s111 = sshll.u32 [#allocation3], 4
      %s112 = int_to_ptr.vmem [resolvable:$true] %s111
      %s113 = sshll.u32 %s5, 4
      %s114 = int_to_ptr.hbm [resolvable:$true] %s113
      %116 = dma.vmem_to_hbm [thread:$0]  %s112, 16, %s114, [#allocation4]
    $region33: #{tpu_custom_call.1} parent=1 // pred_fallthru
      _
    // Predicated region
    $region34: #{tpu_custom_call.1} parent=1 // pred_check
      _
    $region35: #{tpu_custom_call.1} parent=1 // pred_check_branch
      %118 = sbr.rel (0) target = $region37
    $region36: #{tpu_custom_call.1} parent=1 // pred_region
      %120 = dma.done [#allocation4], 16
    $region37: #{tpu_custom_call.1} parent=1 // pred_fallthru
      _
    %121 = vsyncpa [#allocation4], 1

</llo_original>
